<compile_context>
chip_gen: v7x
topology: tpu7x:2x2x1
jax: 0.10.0
libtpu: 0.0.40
codegen_flags: <defaults>
</compile_context>

<pallas_src>
import functools

import jax
import jax.numpy as jnp
from jax.experimental import pallas as pl
from jax.experimental.pallas import tpu as pltpu


def _head_kernel(ref_cls_ref, alt_cls_ref, wp_ref, bp_ref, wc_ref, bc_ref,
                 logits_ref):
    """Fused pooler + differential + classification head for one batch tile.

    ref_cls_ref, alt_cls_ref : (TILE_B, H)   CLS-token hidden states
    wp_ref                   : (H, H)        pooler weight (pre-transposed)
    bp_ref                   : (1, H)        pooler bias
    wc_ref                   : (H, C_pad)    head weight (pre-transposed, zero-padded)
    bc_ref                   : (1, C_pad)    head bias (zero-padded)
    logits_ref               : (TILE_B, C_pad) output logits (lane-dense)
    """
    tb = ref_cls_ref.shape[0]

    # One MXU pass over the (H, H) pooler weight for both ref and alt.
    x = jnp.concatenate([ref_cls_ref[...], alt_cls_ref[...]], axis=0)  # (2*TB, H)
    pooled = jnp.tanh(
        jnp.dot(x, wp_ref[...], preferred_element_type=jnp.float32)
        + bp_ref[...])                                                 # (2*TB, H)

    # Differential encoding: alt - ref.
    diff = pooled[tb:, :] - pooled[:tb, :]                             # (TB, H)

    # Classification head (lane-dense, padded N).
    logits = (jnp.dot(diff, wc_ref[...], preferred_element_type=jnp.float32)
              + bc_ref[...])                                           # (TB, C_pad)
    logits_ref[...] = logits.astype(logits_ref.dtype)


def _round_up(x, m):
    return ((x + m - 1) // m) * m


@functools.partial(jax.jit, static_argnames=())
def classification_head_forward(ref_cls, alt_cls, wp, bp, wc, bc):
    """Fused pooler + diff + head on CLS tokens.

    ref_cls, alt_cls : (B, H) f32
    wp : (H, H), bp : (1, H), wc : (H, C), bc : (1, C)
    returns logits : (B, C) f32
    """
    B, H = ref_cls.shape
    C = wc.shape[1]

    # Lane-dense output: pad head columns up to a multiple of 128.
    C_pad = _round_up(max(C, 128), 128)
    wc_p = jnp.zeros((H, C_pad), wc.dtype).at[:, :C].set(wc)
    bc_p = jnp.zeros((1, C_pad), bc.dtype).at[:, :C].set(bc)

    # Batch tiling: single shot for small B, 256-row tiles (sublane-aligned)
    # otherwise.  Pad B so the grid divides evenly.
    TILE_B = B if B <= 256 else 256
    B_pad = _round_up(B, TILE_B)
    if B_pad != B:
        pad = B_pad - B
        ref_cls = jnp.pad(ref_cls, ((0, pad), (0, 0)))
        alt_cls = jnp.pad(alt_cls, ((0, pad), (0, 0)))
    n_tiles = B_pad // TILE_B

    logits_padded = pl.pallas_call(
        _head_kernel,
        out_shape=jax.ShapeDtypeStruct((B_pad, C_pad), jnp.float32),
        grid_spec=pltpu.PrefetchScalarGridSpec(
            num_scalar_prefetch=0,
            grid=(n_tiles,),
            in_specs=[
                pl.BlockSpec((TILE_B, H), lambda i: (i, 0)),   # ref CLS tile
                pl.BlockSpec((TILE_B, H), lambda i: (i, 0)),   # alt CLS tile
                pl.BlockSpec((H, H), lambda i: (0, 0)),        # pooler W (resident)
                pl.BlockSpec((1, H), lambda i: (0, 0)),        # pooler b (resident)
                pl.BlockSpec((H, C_pad), lambda i: (0, 0)),    # head W (resident)
                pl.BlockSpec((1, C_pad), lambda i: (0, 0)),    # head b (resident)
            ],
            out_specs=pl.BlockSpec((TILE_B, C_pad), lambda i: (i, 0)),
        ),
        compiler_params=pltpu.CompilerParams(
            dimension_semantics=("parallel",)),
    )(ref_cls, alt_cls, wp, bp, wc_p, bc_p)

    return logits_padded[:B, :C]


# ----------------------------------------------------------------------------
# Synthetic "base model" (glue, plain JAX): deterministic embedding lookup.
# TODO(synk): the real base_model is an external pretrained transformer and is
# out of scope; it is replaced by an embedding-table lookup producing
# last_hidden_state of shape (B, S, H).
# ----------------------------------------------------------------------------
def synthetic_base_model(input_ids, embed_table):
    return jnp.take(embed_table, input_ids, axis=0)   # (B, S, H)


def wrapped_model_forward(ref_input_ids, alt_input_ids, params):
    """Mirrors WrappedModelWithClassificationHead.forward (decoder=False,
    hidden_states_pooler=True, labels=None)."""
    ref_hidden = synthetic_base_model(ref_input_ids, params["embed"])
    alt_hidden = synthetic_base_model(alt_input_ids, params["embed"])

    # CLS extraction done in the wrapper so only (B, H) is DMA'd into VMEM.
    ref_cls = ref_hidden[:, 0, :]
    alt_cls = alt_hidden[:, 0, :]

    logits = classification_head_forward(
        ref_cls, alt_cls,
        params["pooler_w"], params["pooler_b"],
        params["head_w"], params["head_b"],
    )
    return {"loss": None, "logits": logits}


def _reference_forward(ref_input_ids, alt_input_ids, params):
    """Pure-JAX reference for correctness checking."""
    ref_h = synthetic_base_model(ref_input_ids, params["embed"])
    alt_h = synthetic_base_model(alt_input_ids, params["embed"])
    ref_cls = ref_h[:, 0, :]
    alt_cls = alt_h[:, 0, :]
    p_ref = jnp.tanh(ref_cls @ params["pooler_w"] + params["pooler_b"])
    p_alt = jnp.tanh(alt_cls @ params["pooler_w"] + params["pooler_b"])
    diff = p_alt - p_ref
    return diff @ params["head_w"] + params["head_b"]


if __name__ == "__main__":
    # Small shapes: batch=8, seq=8, hidden=128, num_classes=4, vocab=32
    B, S, H, C, V = 8, 8, 128, 4, 32

    key = jax.random.PRNGKey(0)
    k_emb, k_pw, k_pb, k_hw, k_hb, k_ref, k_alt = jax.random.split(key, 7)

    params = {
        "embed":    jax.random.normal(k_emb, (V, H), jnp.float32) * 0.1,
        # nn.Linear(H, H) weight stored transposed as (in, out)
        "pooler_w": jax.random.normal(k_pw, (H, H), jnp.float32) * 0.05,
        "pooler_b": jax.random.normal(k_pb, (1, H), jnp.float32) * 0.05,
        # nn.Linear(H, C) weight stored transposed as (in, out)
        "head_w":   jax.random.normal(k_hw, (H, C), jnp.float32) * 0.05,
        "head_b":   jax.random.normal(k_hb, (1, C), jnp.float32) * 0.05,
    }

    ref_input_ids = jax.random.randint(k_ref, (B, S), 0, V)
    alt_input_ids = jax.random.randint(k_alt, (B, S), 0, V)

    out = wrapped_model_forward(ref_input_ids, alt_input_ids, params)
    logits = jax.block_until_ready(out["logits"])

    expected = _reference_forward(ref_input_ids, alt_input_ids, params)
    assert logits.shape == (B, C)
    assert jnp.allclose(logits, expected, atol=1e-4, rtol=1e-4), "mismatch vs reference"

    print("KERNEL_OK")
</pallas_src>

<mosaic_0001>
module attributes {stable_mosaic.version = 11 : i64} {
  func.func @_head_kernel(%arg0: i32, %arg1: memref<8x128xf32, #tpu.memory_space<vmem>>, %arg2: memref<8x128xf32, #tpu.memory_space<vmem>>, %arg3: memref<128x128xf32, #tpu.memory_space<vmem>>, %arg4: memref<1x128xf32, #tpu.memory_space<vmem>>, %arg5: memref<128x128xf32, #tpu.memory_space<vmem>>, %arg6: memref<1x128xf32, #tpu.memory_space<vmem>>, %arg7: memref<8x128xf32, #tpu.memory_space<vmem>>) attributes {dimension_semantics = [#tpu.dimension_semantics<parallel>], iteration_bounds = array<i64: 1>, scalar_prefetch = 0 : i64, scratch_operands = 0 : i64, tpu.core_type = #tpu.core_type<tc>, window_params = [{transform_indices = @transform_0, window_bounds = array<i64: 8, 128>}, {transform_indices = @transform_1, window_bounds = array<i64: 8, 128>}, {pipeline_mode = #tpu.pipeline_mode<synchronous>, transform_indices = @transform_2, window_bounds = array<i64: 128, 128>}, {pipeline_mode = #tpu.pipeline_mode<synchronous>, transform_indices = @transform_3, window_bounds = array<i64: 1, 128>}, {pipeline_mode = #tpu.pipeline_mode<synchronous>, transform_indices = @transform_4, window_bounds = array<i64: 128, 128>}, {pipeline_mode = #tpu.pipeline_mode<synchronous>, transform_indices = @transform_5, window_bounds = array<i64: 1, 128>}, {transform_indices = @transform_6, window_bounds = array<i64: 8, 128>}]} {
    %c0 = arith.constant 0 : index
    %c0_0 = arith.constant 0 : index
    %0 = vector.load %arg1[%c0, %c0_0] : memref<8x128xf32, #tpu.memory_space<vmem>>, vector<8x128xf32>
    %c0_1 = arith.constant 0 : index
    %c0_2 = arith.constant 0 : index
    %1 = vector.load %arg2[%c0_1, %c0_2] : memref<8x128xf32, #tpu.memory_space<vmem>>, vector<8x128xf32>
    %2 = tpu.concatenate %0, %1 in 0 : vector<8x128xf32>, vector<8x128xf32> -> vector<16x128xf32>
    %c0_3 = arith.constant 0 : index
    %c0_4 = arith.constant 0 : index
    %3 = vector.load %arg3[%c0_3, %c0_4] : memref<128x128xf32, #tpu.memory_space<vmem>>, vector<128x128xf32>
    %cst = arith.constant dense<0.000000e+00> : vector<16x128xf32>
    %4 = tpu.matmul %2, %3, %cst {dimension_numbers = #tpu.dot_dimension_numbers<[1], [0], [0], [1], [0, 0, 1, 1], [], []>} : vector<16x128xf32>, vector<128x128xf32>, vector<16x128xf32> -> vector<16x128xf32>
    %c0_5 = arith.constant 0 : index
    %c0_6 = arith.constant 0 : index
    %5 = vector.load %arg4[%c0_5, %c0_6] : memref<1x128xf32, #tpu.memory_space<vmem>>, vector<1x128xf32>
    %6 = vector.broadcast %5 : vector<1x128xf32> to vector<16x128xf32>
    %7 = arith.addf %4, %6 : vector<16x128xf32>
    %8 = math.tanh %7 : vector<16x128xf32>
    %9 = vector.extract_strided_slice %8 {offsets = [8, 0], sizes = [8, 128], strides = [1, 1]} : vector<16x128xf32> to vector<8x128xf32>
    %10 = vector.extract_strided_slice %8 {offsets = [0, 0], sizes = [8, 128], strides = [1, 1]} : vector<16x128xf32> to vector<8x128xf32>
    %11 = arith.subf %9, %10 : vector<8x128xf32>
    %c0_7 = arith.constant 0 : index
    %c0_8 = arith.constant 0 : index
    %12 = vector.load %arg5[%c0_7, %c0_8] : memref<128x128xf32, #tpu.memory_space<vmem>>, vector<128x128xf32>
    %cst_9 = arith.constant dense<0.000000e+00> : vector<8x128xf32>
    %13 = tpu.matmul %11, %12, %cst_9 {dimension_numbers = #tpu.dot_dimension_numbers<[1], [0], [0], [1], [0, 0, 1, 1], [], []>} : vector<8x128xf32>, vector<128x128xf32>, vector<8x128xf32> -> vector<8x128xf32>
    %c0_10 = arith.constant 0 : index
    %c0_11 = arith.constant 0 : index
    %14 = vector.load %arg6[%c0_10, %c0_11] : memref<1x128xf32, #tpu.memory_space<vmem>>, vector<1x128xf32>
    %15 = vector.broadcast %14 : vector<1x128xf32> to vector<8x128xf32>
    %16 = arith.addf %13, %15 : vector<8x128xf32>
    %c0_12 = arith.constant 0 : index
    %c0_13 = arith.constant 0 : index
    %17 = vector.load %arg7[%c0_12, %c0_13] : memref<8x128xf32, #tpu.memory_space<vmem>>, vector<8x128xf32>
    tpu.vector_store %arg7[%c0_12, %c0_13], %16 {strides = array<i32>} : memref<8x128xf32, #tpu.memory_space<vmem>>, vector<8x128xf32>,
    return
  }
  func.func @transform_0(%arg0: i32) -> (i32, i32) {
    %c0_i32 = arith.constant 0 : i32
    %c0_i32_0 = arith.constant 0 : i32
    return %arg0, %c0_i32 : i32, i32
  }
  func.func @transform_1(%arg0: i32) -> (i32, i32) {
    %c0_i32 = arith.constant 0 : i32
    %c0_i32_0 = arith.constant 0 : i32
    return %arg0, %c0_i32 : i32, i32
  }
  func.func @transform_2(%arg0: i32) -> (i32, i32) {
    %c0_i32 = arith.constant 0 : i32
    %c0_i32_0 = arith.constant 0 : i32
    %c0_i32_1 = arith.constant 0 : i32
    return %c0_i32, %c0_i32_0 : i32, i32
  }
  func.func @transform_3(%arg0: i32) -> (i32, i32) {
    %c0_i32 = arith.constant 0 : i32
    %c0_i32_0 = arith.constant 0 : i32
    %c0_i32_1 = arith.constant 0 : i32
    return %c0_i32, %c0_i32_0 : i32, i32
  }
  func.func @transform_4(%arg0: i32) -> (i32, i32) {
    %c0_i32 = arith.constant 0 : i32
    %c0_i32_0 = arith.constant 0 : i32
    %c0_i32_1 = arith.constant 0 : i32
    return %c0_i32, %c0_i32_0 : i32, i32
  }
  func.func @transform_5(%arg0: i32) -> (i32, i32) {
    %c0_i32 = arith.constant 0 : i32
    %c0_i32_0 = arith.constant 0 : i32
    %c0_i32_1 = arith.constant 0 : i32
    return %c0_i32, %c0_i32_0 : i32, i32
  }
  func.func @transform_6(%arg0: i32) -> (i32, i32) {
    %c0_i32 = arith.constant 0 : i32
    %c0_i32_0 = arith.constant 0 : i32
    return %arg0, %c0_i32 : i32, i32
  }
}

</mosaic_0001>

<llo_original>
// kernel: classification_head_forward.1
$region0: #{classification_head_forward.1}
  #allocation0 [shape = 'u32[]', space=smem, size = 0x4, offset = 0x4, fixed_abs, tag = 'smem constant byte address 0x4 - core index']
  #allocation1 [shape = 'u32[144,128]{1,0:T(1,128)}', space=vmem, size = 0x12000, scoped, tag = 'internal scratch']
  %s0 = inlined_call_operand.vmem [shape: f32[8,128], index: 0, kind: input, shape index: {}]
  %s1 = inlined_call_operand.vmem [shape: f32[8,128], index: 1, kind: input, shape index: {}]
  %s2 = inlined_call_operand.vmem [shape: f32[128,128], index: 2, kind: input, shape index: {}]
  %s3 = inlined_call_operand.vmem [shape: f32[1,128], index: 3, kind: input, shape index: {}]
  %s4 = inlined_call_operand.vmem [shape: f32[128,128], index: 4, kind: input, shape index: {}]
  %s5 = inlined_call_operand.vmem [shape: f32[1,128], index: 5, kind: input, shape index: {}]
  %s6 = inlined_call_operand.vmem [shape: f32[8,128], index: 6, kind: output, shape index: {}]
  %s7 = sld [smem:[#allocation0]]
  $region34: #{classification_head_forward.1} parent=0
    _
  %s9 = ssub.s32 1, %s7
  %s10 = scalar_select 0, %s9, %s7
  // Predicated region
  $region2: #{classification_head_forward.1} parent=0 // pred_check
    _
  $region3: #{classification_head_forward.1} parent=0 // pred_check_branch
    %12 = sbr.rel (0) target = $region5
  $region4: #{classification_head_forward.1} parent=0 // pred_region
    _
  $region5: #{classification_head_forward.1} parent=0 // pred_fallthru
    _
  // Predicated region
  $region6: #{classification_head_forward.1} parent=0 // pred_check
    _
  $region7: #{classification_head_forward.1} parent=0 // pred_check_branch
    %14 = sbr.rel (0) target = $region9
  $region8: #{classification_head_forward.1} parent=0 // pred_region
    _
  $region9: #{classification_head_forward.1} parent=0 // pred_fallthru
    _
  // Predicated region
  $region10: #{classification_head_forward.1} parent=0 // pred_check
    _
  $region11: #{classification_head_forward.1} parent=0 // pred_check_branch
    %16 = sbr.rel (0) target = $region13
  $region12: #{classification_head_forward.1} parent=0 // pred_region
    _
  $region13: #{classification_head_forward.1} parent=0 // pred_fallthru
    _
  // Predicated region
  $region14: #{classification_head_forward.1} parent=0 // pred_check
    _
  $region15: #{classification_head_forward.1} parent=0 // pred_check_branch
    %18 = sbr.rel (0) target = $region17
  $region16: #{classification_head_forward.1} parent=0 // pred_region
    _
  $region17: #{classification_head_forward.1} parent=0 // pred_fallthru
    _
  // Predicated region
  $region18: #{classification_head_forward.1} parent=0 // pred_check
    _
  $region19: #{classification_head_forward.1} parent=0 // pred_check_branch
    %20 = sbr.rel (0) target = $region21
  $region20: #{classification_head_forward.1} parent=0 // pred_region
    _
  $region21: #{classification_head_forward.1} parent=0 // pred_fallthru
    _
  // Predicated region
  $region22: #{classification_head_forward.1} parent=0 // pred_check
    _
  $region23: #{classification_head_forward.1} parent=0 // pred_check_branch
    %22 = sbr.rel (0) target = $region25
  $region24: #{classification_head_forward.1} parent=0 // pred_region
    _
  $region25: #{classification_head_forward.1} parent=0 // pred_fallthru
    _
  %v23 = vld [vmem:[%s0] sm:$0xff]
  %v24 = vld [vmem:[%s1] sm:$0xff]
  %v25 = vld [vmem:[%s2] sm:$0xff]
  %v26 = vld [vmem:[%s2 + $0x8] sm:$0xff]
  %v27 = vld [vmem:[%s2 + $0x10] sm:$0xff]
  %v28 = vld [vmem:[%s2 + $0x18] sm:$0xff]
  %v29 = vld [vmem:[%s2 + $0x20] sm:$0xff]
  %v30 = vld [vmem:[%s2 + $0x28] sm:$0xff]
  %v31 = vld [vmem:[%s2 + $0x30] sm:$0xff]
  %v32 = vld [vmem:[%s2 + $0x38] sm:$0xff]
  %v33 = vld [vmem:[%s2 + $0x40] sm:$0xff]
  %v34 = vld [vmem:[%s2 + $0x48] sm:$0xff]
  %v35 = vld [vmem:[%s2 + $0x50] sm:$0xff]
  %v36 = vld [vmem:[%s2 + $0x58] sm:$0xff]
  %v37 = vld [vmem:[%s2 + $0x60] sm:$0xff]
  %v38 = vld [vmem:[%s2 + $0x68] sm:$0xff]
  %v39 = vld [vmem:[%s2 + $0x70] sm:$0xff]
  %v40 = vld [vmem:[%s2 + $0x78] sm:$0xff]
  %v41 = vld [vmem:[%s3] sm:$0x1]
  %v43 = vlaneseq
  %v44 = vshrl.u32 %v43, 7
  %v45 = vsub.s32 0, %v44
  %v46 = vrot.slane %v41, %v45
  %48 = vmatprep.subr.mxu0 0.0
  %49 = vmatpush1.msra.mxu0 %v25
  %50 = vmatprep.subr.mxu0 0.0
  %51 = vmatpush1.msra.mxu0 %v26
  %52 = vmatprep.subr.mxu0 0.0
  %53 = vmatpush1.msra.mxu0 %v27
  %54 = vmatprep.subr.mxu0 0.0
  %55 = vmatpush1.msra.mxu0 %v28
  %56 = vmatprep.subr.mxu0 0.0
  %57 = vmatpush1.msra.mxu0 %v29
  %58 = vmatprep.subr.mxu0 0.0
  %59 = vmatpush1.msra.mxu0 %v30
  %60 = vmatprep.subr.mxu0 0.0
  %61 = vmatpush1.msra.mxu0 %v31
  %62 = vmatprep.subr.mxu0 0.0
  %63 = vmatpush1.msra.mxu0 %v32
  %64 = vmatprep.subr.mxu0 0.0
  %65 = vmatpush1.msra.mxu0 %v33
  %66 = vmatprep.subr.mxu0 0.0
  %67 = vmatpush1.msra.mxu0 %v34
  %68 = vmatprep.subr.mxu0 0.0
  %69 = vmatpush1.msra.mxu0 %v35
  %70 = vmatprep.subr.mxu0 0.0
  %71 = vmatpush1.msra.mxu0 %v36
  %72 = vmatprep.subr.mxu0 0.0
  %73 = vmatpush1.msra.mxu0 %v37
  %74 = vmatprep.subr.mxu0 0.0
  %75 = vmatpush1.msra.mxu0 %v38
  %76 = vmatprep.subr.mxu0 0.0
  %77 = vmatpush1.msra.mxu0 %v39
  %78 = vmatprep.subr.mxu0 0.0
  %79 = vmatpush1.msra.mxu0 %v40
  %80 = vmatprep.subr.mxu0 0.0
  %81 = vmatpush1.msra.mxu0 0.0
  %82 = vmatprep.subr.mxu0 0.0
  %83 = vmatpush1.msra.mxu0 0.0
  %84 = vmatprep.subr.mxu0 0.0
  %85 = vmatpush1.msra.mxu0 0.0
  %86 = vmatprep.subr.mxu0 0.0
  %87 = vmatpush1.msra.mxu0 0.0
  %88 = vmatprep.subr.mxu0 0.0
  %89 = vmatpush1.msra.mxu0 0.0
  %90 = vmatprep.subr.mxu0 0.0
  %91 = vmatpush1.msra.mxu0 0.0
  %92 = vmatprep.subr.mxu0 0.0
  %93 = vmatpush1.msra.mxu0 0.0
  %94 = vmatprep.subr.mxu0 0.0
  %95 = vmatpush1.msra.mxu0 0.0
  %96 = vmatprep.subr.mxu0 0.0
  %97 = vmatpush1.msra.mxu0 0.0
  %98 = vmatprep.subr.mxu0 0.0
  %99 = vmatpush1.msra.mxu0 0.0
  %100 = vmatprep.subr.mxu0 0.0
  %101 = vmatpush1.msra.mxu0 0.0
  %102 = vmatprep.subr.mxu0 0.0
  %103 = vmatpush1.msra.mxu0 0.0
  %104 = vmatprep.subr.mxu0 0.0
  %105 = vmatpush1.msra.mxu0 0.0
  %106 = vmatprep.subr.mxu0 0.0
  %107 = vmatpush1.msra.mxu0 0.0
  %108 = vmatprep.subr.mxu0 0.0
  %109 = vmatpush1.msra.mxu0 0.0
  %110 = vmatprep.subr.mxu0 0.0
  %111 = vmatpush1.msra.mxu0 0.0
  %112 = vmatprep.mubr.f32.mxu0 0.0
  %113 = vmatmul.mubr.f32.gmra.mrb[0].mxu0 %v23
  %v114 = vpop.f32.mrb[0].mxu0
  %v115 = vadd.f32 %v46, %v114
  %v116 = vpop.f32.mrb[0].mxu0
  %117 = vmatprep.mubr.f32.mxu0 0.0
  %118 = vmatmul.mubr.f32.gmra.mrb[0].mxu0 %v24
  %v119 = vpop.f32.mrb[0].mxu0
  %v120 = vadd.f32 %v46, %v119
  %v121 = vpop.f32.mrb[0].mxu0
  %122 = vdwg.mxu0
  %v123 = vtanh.pop %v115
  %v124 = vtanh.pop %v120
  %v125 = vsub.f32 %v124, %v123
  %v126 = vld [vmem:[%s4] sm:$0xff]
  %v127 = vld [vmem:[%s4 + $0x8] sm:$0xff]
  %v128 = vld [vmem:[%s4 + $0x10] sm:$0xff]
  %v129 = vld [vmem:[%s4 + $0x18] sm:$0xff]
  %v130 = vld [vmem:[%s4 + $0x20] sm:$0xff]
  %v131 = vld [vmem:[%s4 + $0x28] sm:$0xff]
  %v132 = vld [vmem:[%s4 + $0x30] sm:$0xff]
  %v133 = vld [vmem:[%s4 + $0x38] sm:$0xff]
  %v134 = vld [vmem:[%s4 + $0x40] sm:$0xff]
  %v135 = vld [vmem:[%s4 + $0x48] sm:$0xff]
  %v136 = vld [vmem:[%s4 + $0x50] sm:$0xff]
  %v137 = vld [vmem:[%s4 + $0x58] sm:$0xff]
  %v138 = vld [vmem:[%s4 + $0x60] sm:$0xff]
  %v139 = vld [vmem:[%s4 + $0x68] sm:$0xff]
  %v140 = vld [vmem:[%s4 + $0x70] sm:$0xff]
  %v141 = vld [vmem:[%s4 + $0x78] sm:$0xff]
  %v142 = vld [vmem:[%s5] sm:$0x1]
  %v144 = vlaneseq
  %v145 = vshrl.u32 %v144, 7
  %v146 = vsub.s32 0, %v145
  %v147 = vrot.slane %v142, %v146
  %149 = vmatprep.subr.mxu0 0.0
  %150 = vmatpush1.msra.mxu0 %v126
  %151 = vmatprep.subr.mxu0 0.0
  %152 = vmatpush1.msra.mxu0 %v127
  %153 = vmatprep.subr.mxu0 0.0
  %154 = vmatpush1.msra.mxu0 %v128
  %155 = vmatprep.subr.mxu0 0.0
  %156 = vmatpush1.msra.mxu0 %v129
  %157 = vmatprep.subr.mxu0 0.0
  %158 = vmatpush1.msra.mxu0 %v130
  %159 = vmatprep.subr.mxu0 0.0
  %160 = vmatpush1.msra.mxu0 %v131
  %161 = vmatprep.subr.mxu0 0.0
  %162 = vmatpush1.msra.mxu0 %v132
  %163 = vmatprep.subr.mxu0 0.0
  %164 = vmatpush1.msra.mxu0 %v133
  %165 = vmatprep.subr.mxu0 0.0
  %166 = vmatpush1.msra.mxu0 %v134
  %167 = vmatprep.subr.mxu0 0.0
  %168 = vmatpush1.msra.mxu0 %v135
  %169 = vmatprep.subr.mxu0 0.0
  %170 = vmatpush1.msra.mxu0 %v136
  %171 = vmatprep.subr.mxu0 0.0
  %172 = vmatpush1.msra.mxu0 %v137
  %173 = vmatprep.subr.mxu0 0.0
  %174 = vmatpush1.msra.mxu0 %v138
  %175 = vmatprep.subr.mxu0 0.0
  %176 = vmatpush1.msra.mxu0 %v139
  %177 = vmatprep.subr.mxu0 0.0
  %178 = vmatpush1.msra.mxu0 %v140
  %179 = vmatprep.subr.mxu0 0.0
  %180 = vmatpush1.msra.mxu0 %v141
  %181 = vmatprep.subr.mxu0 0.0
  %182 = vmatpush1.msra.mxu0 0.0
  %183 = vmatprep.subr.mxu0 0.0
  %184 = vmatpush1.msra.mxu0 0.0
  %185 = vmatprep.subr.mxu0 0.0
  %186 = vmatpush1.msra.mxu0 0.0
  %187 = vmatprep.subr.mxu0 0.0
  %188 = vmatpush1.msra.mxu0 0.0
  %189 = vmatprep.subr.mxu0 0.0
  %190 = vmatpush1.msra.mxu0 0.0
  %191 = vmatprep.subr.mxu0 0.0
  %192 = vmatpush1.msra.mxu0 0.0
  %193 = vmatprep.subr.mxu0 0.0
  %194 = vmatpush1.msra.mxu0 0.0
  %195 = vmatprep.subr.mxu0 0.0
  %196 = vmatpush1.msra.mxu0 0.0
  %197 = vmatprep.subr.mxu0 0.0
  %198 = vmatpush1.msra.mxu0 0.0
  %199 = vmatprep.subr.mxu0 0.0
  %200 = vmatpush1.msra.mxu0 0.0
  %201 = vmatprep.subr.mxu0 0.0
  %202 = vmatpush1.msra.mxu0 0.0
  %203 = vmatprep.subr.mxu0 0.0
  %204 = vmatpush1.msra.mxu0 0.0
  %205 = vmatprep.subr.mxu0 0.0
  %206 = vmatpush1.msra.mxu0 0.0
  %207 = vmatprep.subr.mxu0 0.0
  %208 = vmatpush1.msra.mxu0 0.0
  %209 = vmatprep.subr.mxu0 0.0
  %210 = vmatpush1.msra.mxu0 0.0
  %211 = vmatprep.subr.mxu0 0.0
  %212 = vmatpush1.msra.mxu0 0.0
  %213 = vmatprep.mubr.f32.mxu0 0.0
  %214 = vmatmul.mubr.f32.gmra.mrb[0].mxu0 %v125
  %v215 = vpop.f32.mrb[0].mxu0
  %v216 = vadd.f32 %v147, %v215
  %v217 = vpop.f32.mrb[0].mxu0
  %218 = vdwg.mxu0
  %219 = vst [vmem:[%s6] sm:$0xff] %v216
  // Predicated region
  $region26: #{classification_head_forward.1} parent=0 // pred_check
    _
  $region27: #{classification_head_forward.1} parent=0 // pred_check_branch
    %221 = sbr.rel (0) target = $region29
  $region28: #{classification_head_forward.1} parent=0 // pred_region
    _
  $region29: #{classification_head_forward.1} parent=0 // pred_fallthru
    _
  // Predicated region
  $region30: #{classification_head_forward.1} parent=0 // pred_check
    _
  $region31: #{classification_head_forward.1} parent=0 // pred_check_branch
    %223 = sbr.rel (0) target = $region33
  $region32: #{classification_head_forward.1} parent=0 // pred_region
    _
  $region33: #{classification_head_forward.1} parent=0 // pred_fallthru
    _

</llo_original>
